<compile_context>
chip_gen: v5e
topology: v5e:2x2
jax: 0.10.0
libtpu: 0.0.40
codegen_flags: <defaults>
</compile_context>

<pallas_src>
import functools

import jax
import jax.numpy as jnp
from jax.experimental import pallas as pl
from jax.experimental.pallas import tpu as pltpu

# ----------------------------- constants -------------------------------------
HARTREE_TO_KCAL_MOL = 627.509
ANGS_TO_BOHR = 1.0 / 0.529177208

# D3(BJ) damping parameters (functional -> s6, s8, a1, a2)
D3BJ_PARAMS = {"b3lyp": dict(s6=1.0, s8=1.9889, a1=0.3981, a2=4.4211)}

F_DIM = 32      # PaiNN feature dimension
N_RBF = 16      # radial basis size
NUM_CONV = 1    # TODO(synk): real PaiNN default uses 3 message/update blocks; 1 keeps compile small
CUTOFF = 5.0    # Angstrom

MXU_DTYPE = jnp.bfloat16          # MXU storage dtype; accumulation stays float32
_VMEM_LIMIT = 40 * 1024 * 1024    # sized so the dispersion working set fits v7x's 64 MiB/TC


def _round_up(x, m):
    return ((x + m - 1) // m) * m


def _row_tile(m):
    # Row tile: 128 keeps (TILE_I x N) pairwise planes well under ~40 MiB on v7x for N ~ 4k.
    return 128 if m >= 128 else 8


def _pad_rows(x, m_pad):
    m = x.shape[0]
    if m == m_pad:
        return x
    return jnp.pad(x, ((0, m_pad - m), (0, 0)))


# ------------------------- fused linear (x @ w + b) ---------------------------
def _linear_fwd_kernel(x_ref, w_ref, b_ref, o_ref):
    x = x_ref[...].astype(MXU_DTYPE)
    w = w_ref[...].astype(MXU_DTYPE)
    o_ref[...] = jnp.dot(x, w, preferred_element_type=jnp.float32) + b_ref[...]


def _linear_bwd_kernel(x_ref, g_ref, w_ref, dx_ref, dw_ref, db_ref):
    @pl.when(pl.program_id(0) == 0)
    def _():
        dw_ref[...] = jnp.zeros_like(dw_ref)
        db_ref[...] = jnp.zeros_like(db_ref)

    x = x_ref[...]
    g = g_ref[...]
    w = w_ref[...]
    # dx = g @ w.T — transpose folded into the MXU contraction (no wrapper-side .T).
    dx_ref[...] = jax.lax.dot_general(
        g.astype(MXU_DTYPE), w.astype(MXU_DTYPE),
        dimension_numbers=(((1,), (1,)), ((), ())),
        preferred_element_type=jnp.float32)
    # dw += x.T @ g — contraction over rows, accumulated across the row grid.
    dw_ref[...] += jax.lax.dot_general(
        x.astype(MXU_DTYPE), g.astype(MXU_DTYPE),
        dimension_numbers=(((0,), (0,)), ((), ())),
        preferred_element_type=jnp.float32)
    db_ref[...] += jnp.sum(g, axis=0, keepdims=True)


def _linear_fwd_call(x, w, b):
    m, k = x.shape
    n = w.shape[1]
    tile = _row_tile(m)
    m_pad = _round_up(m, tile)
    x_p = _pad_rows(x.astype(jnp.float32), m_pad)
    y = pl.pallas_call(
        _linear_fwd_kernel,
        out_shape=jax.ShapeDtypeStruct((m_pad, n), jnp.float32),
        grid=(m_pad // tile,),
        in_specs=[pl.BlockSpec((tile, k), lambda i: (i, 0)),
                  pl.BlockSpec((k, n), lambda i: (0, 0)),
                  pl.BlockSpec((1, n), lambda i: (0, 0))],
        out_specs=pl.BlockSpec((tile, n), lambda i: (i, 0)),
        compiler_params=pltpu.CompilerParams(
            dimension_semantics=("parallel",),
            vmem_limit_bytes=_VMEM_LIMIT),
    )(x_p, w.astype(jnp.float32), b.astype(jnp.float32))
    return y[:m]


def _linear_bwd_call(x, g, w):
    m, k = x.shape
    n = w.shape[1]
    tile = _row_tile(m)
    m_pad = _round_up(m, tile)
    x_p = _pad_rows(x.astype(jnp.float32), m_pad)
    g_p = _pad_rows(g.astype(jnp.float32), m_pad)
    dx, dw, db = pl.pallas_call(
        _linear_bwd_kernel,
        out_shape=(jax.ShapeDtypeStruct((m_pad, k), jnp.float32),
                   jax.ShapeDtypeStruct((k, n), jnp.float32),
                   jax.ShapeDtypeStruct((1, n), jnp.float32)),
        grid=(m_pad // tile,),
        in_specs=[pl.BlockSpec((tile, k), lambda i: (i, 0)),
                  pl.BlockSpec((tile, n), lambda i: (i, 0)),
                  pl.BlockSpec((k, n), lambda i: (0, 0))],
        out_specs=(pl.BlockSpec((tile, k), lambda i: (i, 0)),
                   pl.BlockSpec((k, n), lambda i: (0, 0)),
                   pl.BlockSpec((1, n), lambda i: (0, 0))),
        compiler_params=pltpu.CompilerParams(
            dimension_semantics=("arbitrary",),   # weight grads accumulate across row blocks
            vmem_limit_bytes=_VMEM_LIMIT),
    )(x_p, g_p, w.astype(jnp.float32))
    return dx[:m], dw, db


@jax.custom_vjp
def pallas_linear(x, w, b):
    """y = x @ w + b as one row-tiled Pallas kernel (bf16 MXU operands, f32 accum)."""
    return _linear_fwd_call(x, w, b)


def _pallas_linear_fwd(x, w, b):
    return _linear_fwd_call(x, w, b), (x, w)


def _pallas_linear_bwd(res, g):
    x, w = res
    dx, dw, db = _linear_bwd_call(x, g, w)
    return dx, dw, db


pallas_linear.defvjp(_pallas_linear_fwd, _pallas_linear_bwd)


# --------------------- fused dense -> SiLU -> dense MLP ------------------------
def _mlp2_fwd_kernel(x_ref, w1_ref, b1_ref, w2_ref, b2_ref, y_ref, p_ref):
    x = x_ref[...]
    p = (jnp.dot(x.astype(MXU_DTYPE), w1_ref[...].astype(MXU_DTYPE),
                 preferred_element_type=jnp.float32) + b1_ref[...])
    h = p * jax.nn.sigmoid(p)                       # SiLU stays in VMEM (no HBM round-trip)
    y_ref[...] = (jnp.dot(h.astype(MXU_DTYPE), w2_ref[...].astype(MXU_DTYPE),
                          preferred_element_type=jnp.float32) + b2_ref[...])
    p_ref[...] = p                                  # pre-activation saved for the VJP


def _mlp2_bwd_kernel(x_ref, p_ref, g_ref, w1_ref, w2_ref,
                     dx_ref, dw1_ref, db1_ref, dw2_ref, db2_ref):
    @pl.when(pl.program_id(0) == 0)
    def _():
        dw1_ref[...] = jnp.zeros_like(dw1_ref)
        db1_ref[...] = jnp.zeros_like(db1_ref)
        dw2_ref[...] = jnp.zeros_like(dw2_ref)
        db2_ref[...] = jnp.zeros_like(db2_ref)

    x = x_ref[...]
    p = p_ref[...]
    g = g_ref[...]
    sig = jax.nn.sigmoid(p)
    h = p * sig
    dh = jax.lax.dot_general(                       # g @ w2.T
        g.astype(MXU_DTYPE), w2_ref[...].astype(MXU_DTYPE),
        dimension_numbers=(((1,), (1,)), ((), ())),
        preferred_element_type=jnp.float32)
    dp = dh * (sig * (1.0 + p * (1.0 - sig)))       # SiLU'
    dx_ref[...] = jax.lax.dot_general(              # dp @ w1.T
        dp.astype(MXU_DTYPE), w1_ref[...].astype(MXU_DTYPE),
        dimension_numbers=(((1,), (1,)), ((), ())),
        preferred_element_type=jnp.float32)
    dw1_ref[...] += jax.lax.dot_general(            # x.T @ dp
        x.astype(MXU_DTYPE), dp.astype(MXU_DTYPE),
        dimension_numbers=(((0,), (0,)), ((), ())),
        preferred_element_type=jnp.float32)
    db1_ref[...] += jnp.sum(dp, axis=0, keepdims=True)
    dw2_ref[...] += jax.lax.dot_general(            # h.T @ g
        h.astype(MXU_DTYPE), g.astype(MXU_DTYPE),
        dimension_numbers=(((0,), (0,)), ((), ())),
        preferred_element_type=jnp.float32)
    db2_ref[...] += jnp.sum(g, axis=0, keepdims=True)


def _mlp2_fwd_call(x, w1, b1, w2, b2):
    m, k = x.shape
    hdim = w1.shape[1]
    n = w2.shape[1]
    tile = _row_tile(m)
    m_pad = _round_up(m, tile)
    x_p = _pad_rows(x.astype(jnp.float32), m_pad)
    y, p = pl.pallas_call(
        _mlp2_fwd_kernel,
        out_shape=(jax.ShapeDtypeStruct((m_pad, n), jnp.float32),
                   jax.ShapeDtypeStruct((m_pad, hdim), jnp.float32)),
        grid=(m_pad // tile,),
        in_specs=[pl.BlockSpec((tile, k), lambda i: (i, 0)),
                  pl.BlockSpec((k, hdim), lambda i: (0, 0)),
                  pl.BlockSpec((1, hdim), lambda i: (0, 0)),
                  pl.BlockSpec((hdim, n), lambda i: (0, 0)),
                  pl.BlockSpec((1, n), lambda i: (0, 0))],
        out_specs=(pl.BlockSpec((tile, n), lambda i: (i, 0)),
                   pl.BlockSpec((tile, hdim), lambda i: (i, 0))),
        compiler_params=pltpu.CompilerParams(
            dimension_semantics=("parallel",),
            vmem_limit_bytes=_VMEM_LIMIT),
    )(x_p, w1.astype(jnp.float32), b1.astype(jnp.float32),
      w2.astype(jnp.float32), b2.astype(jnp.float32))
    return y[:m], p[:m]


def _mlp2_bwd_call(x, p, g, w1, w2):
    m, k = x.shape
    hdim = w1.shape[1]
    n = w2.shape[1]
    tile = _row_tile(m)
    m_pad = _round_up(m, tile)
    x_p = _pad_rows(x.astype(jnp.float32), m_pad)
    p_p = _pad_rows(p.astype(jnp.float32), m_pad)
    g_p = _pad_rows(g.astype(jnp.float32), m_pad)
    dx, dw1, db1, dw2, db2 = pl.pallas_call(
        _mlp2_bwd_kernel,
        out_shape=(jax.ShapeDtypeStruct((m_pad, k), jnp.float32),
                   jax.ShapeDtypeStruct((k, hdim), jnp.float32),
                   jax.ShapeDtypeStruct((1, hdim), jnp.float32),
                   jax.ShapeDtypeStruct((hdim, n), jnp.float32),
                   jax.ShapeDtypeStruct((1, n), jnp.float32)),
        grid=(m_pad // tile,),
        in_specs=[pl.BlockSpec((tile, k), lambda i: (i, 0)),
                  pl.BlockSpec((tile, hdim), lambda i: (i, 0)),
                  pl.BlockSpec((tile, n), lambda i: (i, 0)),
                  pl.BlockSpec((k, hdim), lambda i: (0, 0)),
                  pl.BlockSpec((hdim, n), lambda i: (0, 0))],
        out_specs=(pl.BlockSpec((tile, k), lambda i: (i, 0)),
                   pl.BlockSpec((k, hdim), lambda i: (0, 0)),
                   pl.BlockSpec((1, hdim), lambda i: (0, 0)),
                   pl.BlockSpec((hdim, n), lambda i: (0, 0)),
                   pl.BlockSpec((1, n), lambda i: (0, 0))),
        compiler_params=pltpu.CompilerParams(
            dimension_semantics=("arbitrary",),
            vmem_limit_bytes=_VMEM_LIMIT),
    )(x_p, p_p, g_p, w1.astype(jnp.float32), w2.astype(jnp.float32))
    return dx[:m], dw1, db1, dw2, db2


@jax.custom_vjp
def pallas_mlp2(x, w1, b1, w2, b2):
    """Fused dense -> SiLU -> dense as one Pallas kernel (intermediate never hits HBM)."""
    y, _ = _mlp2_fwd_call(x, w1, b1, w2, b2)
    return y


def _pallas_mlp2_fwd(x, w1, b1, w2, b2):
    y, p = _mlp2_fwd_call(x, w1, b1, w2, b2)
    return y, (x, p, w1, w2)


def _pallas_mlp2_bwd(res, g):
    x, p, w1, w2 = res
    return _mlp2_bwd_call(x, p, g, w1, w2)


pallas_mlp2.defvjp(_pallas_mlp2_fwd, _pallas_mlp2_bwd)


# ---------------------- fused dispersion (energy + grad) -----------------------
def _dispersion_kernel(row_ref, col_ref, out_ref, *, s6, s8, a1, a2):
    rf = row_ref[...]                  # (TILE_I, 8): x y z c6 rr mol valid pad  (i-tile)
    cf = col_ref[...]                  # (8, N): same data transposed, lane-dense on N (all j)
    tile_i = rf.shape[0]
    n = cf.shape[1]

    # Lane-dense (TILE_I, N) pairwise planes — no (.., 3) minor axis anywhere.
    dx = (rf[:, 0:1] - cf[0:1, :]) * ANGS_TO_BOHR
    dy = (rf[:, 1:2] - cf[1:2, :]) * ANGS_TO_BOHR
    dz = (rf[:, 2:3] - cf[2:3, :]) * ANGS_TO_BOHR
    d2 = dx * dx + dy * dy + dz * dz
    d4 = d2 * d2
    d6 = d4 * d2
    d8 = d6 * d2

    # D3(BJ) pair coefficients rebuilt in-kernel from O(N) per-atom data.
    c6ij = jnp.sqrt(rf[:, 3:4] * cf[3:4, :])
    qq = 3.0 * rf[:, 4:5] * cf[4:5, :]
    c8ij = c6ij * qq
    fd = a1 * jnp.sqrt(qq) + a2
    f2 = fd * fd
    f6 = f2 * f2 * f2
    f8 = f6 * f2

    row0 = pl.program_id(0) * tile_i
    ii = jax.lax.broadcasted_iota(jnp.int32, (tile_i, n), 0) + row0
    jj = jax.lax.broadcasted_iota(jnp.int32, (tile_i, n), 1)
    mask = ((ii != jj).astype(jnp.float32)
            * (rf[:, 5:6] == cf[5:6, :]).astype(jnp.float32)     # same molecule
            * rf[:, 6:7] * cf[6:7, :])                           # both atoms real (not padding)

    inv6 = 1.0 / (d6 + f6)                                       # f6 > 0 always -> no div-by-0
    inv8 = 1.0 / (d8 + f8)
    e_pair = -(s6 * c6ij * inv6 + s8 * c8ij * inv8) * mask
    e_atom = 0.5 * jnp.sum(e_pair, axis=1, keepdims=True)        # (TILE_I, 1), Hartree

    de_dd2 = (s6 * c6ij * 3.0 * d4 * inv6 * inv6 +
              s8 * c8ij * 4.0 * d6 * inv8 * inv8) * mask
    scale = 2.0 * ANGS_TO_BOHR                                   # bohr -> Angstrom chain rule
    gx = scale * jnp.sum(de_dd2 * dx, axis=1, keepdims=True)
    gy = scale * jnp.sum(de_dd2 * dy, axis=1, keepdims=True)
    gz = scale * jnp.sum(de_dd2 * dz, axis=1, keepdims=True)

    out_ref[:, 0:1] = e_atom
    out_ref[:, 1:2] = gx
    out_ref[:, 2:3] = gy
    out_ref[:, 3:4] = gz


def dispersion_call(row_feats, col_feats, s6, s8, a1, a2):
    n_pad = row_feats.shape[0]
    tile = _row_tile(n_pad)
    kern = functools.partial(_dispersion_kernel, s6=s6, s8=s8, a1=a1, a2=a2)
    cost = pl.CostEstimate(
        flops=int(60 * n_pad * n_pad),
        transcendentals=int(2 * n_pad * n_pad),
        bytes_accessed=int(4 * (row_feats.size + col_feats.size + 4 * n_pad)))
    return pl.pallas_call(
        kern,
        out_shape=jax.ShapeDtypeStruct((n_pad, 4), jnp.float32),   # [e_atom, gx, gy, gz]
        grid=(n_pad // tile,),
        in_specs=[pl.BlockSpec((tile, 8), lambda i: (i, 0)),
                  pl.BlockSpec((8, n_pad), lambda i: (0, 0))],
        out_specs=pl.BlockSpec((tile, 4), lambda i: (i, 0)),
        compiler_params=pltpu.CompilerParams(
            dimension_semantics=("parallel",),    # row blocks independent -> both v7x TCs
            vmem_limit_bytes=_VMEM_LIMIT),
        cost_estimate=cost,
    )(row_feats, col_feats)


# ----------------------------- PaiNN model ------------------------------------
def init_painn_params(key):
    f = F_DIM
    keys = iter(jax.random.split(key, 64))

    def w(shape, scale=0.1):
        return (scale * jax.random.normal(next(keys), shape)).astype(jnp.float32)

    def b(n):
        return jnp.zeros((1, n), jnp.float32)

    params = {"embed": w((100, f), 1.0), "message": [], "update": []}
    for _ in range(NUM_CONV):
        params["message"].append(dict(
            phi_w1=w((f, f)), phi_b1=b(f),
            phi_w2=w((f, 3 * f)), phi_b2=b(3 * f),
            dist_w=w((N_RBF, 3 * f)), dist_b=b(3 * f),
        ))
        params["update"].append(dict(
            U=w((f, f)), V=w((f, f)),
            a_w1=w((2 * f, f)), a_b1=b(f),
            a_w2=w((f, 3 * f)), a_b2=b(3 * f),
        ))
    params["readout"] = dict(
        w1=w((f, f // 2)), b1=b(f // 2),
        w2=w((f // 2, 1)), b2=b(1),
    )
    return params


def painn_atomwise(params, z, xyz, mol_idx):
    """Per-atom energies (atomwise_out['energy']) — PaiNN message/update/readout."""
    n = xyz.shape[0]
    f = F_DIM
    zero_b = jnp.zeros((1, f), jnp.float32)

    same_mol = mol_idx[:, None] == mol_idx[None, :]
    not_self = ~jnp.eye(n, dtype=bool)
    diff = xyz[:, None, :] - xyz[None, :, :]
    d = jnp.sqrt(jnp.sum(diff * diff, axis=-1) + 1e-12)
    nbr_mask = jax.lax.stop_gradient(
        (same_mol & not_self & (d < CUTOFF)).astype(jnp.float32))
    unit = diff / d[..., None]

    n_vec = jnp.arange(1, N_RBF + 1, dtype=jnp.float32)
    rbf = jnp.sin(n_vec * jnp.pi * d[..., None] / CUTOFF) / d[..., None]   # (N, N, n_rbf)
    fcut = 0.5 * (jnp.cos(jnp.pi * d / CUTOFF) + 1.0) * nbr_mask           # (N, N)

    s = params["embed"][z]                                                 # (N, F)
    v = jnp.zeros((n, 3, f), jnp.float32)

    for blk in range(NUM_CONV):
        mp = params["message"][blk]
        phi = pallas_mlp2(s, mp["phi_w1"], mp["phi_b1"],
                          mp["phi_w2"], mp["phi_b2"])                      # (N, 3F)
        w_rad = pallas_linear(rbf.reshape(n * n, N_RBF),
                              mp["dist_w"], mp["dist_b"]).reshape(n, n, 3 * f)
        # TODO(synk): the (N, N, 3F) message contraction below still materializes in XLA;
        # a j-block streaming Pallas kernel (with its own custom VJP) is the next big win.
        inv = phi[None, :, :] * w_rad * fcut[..., None]                    # (i, j, 3F)
        ds_msg, dvv, dvs = jnp.split(inv, 3, axis=-1)
        ds = jnp.sum(ds_msg, axis=1)                                       # (N, F)
        dv = jnp.sum(dvv[:, :, None, :] * v[None, :, :, :] +
                     dvs[:, :, None, :] * unit[:, :, :, None], axis=1)     # (N, 3, F)
        s = s + ds
        v = v + dv

        up = params["update"][blk]
        uv = pallas_linear(v.reshape(n * 3, f), up["U"], zero_b).reshape(n, 3, f)
        vv = pallas_linear(v.reshape(n * 3, f), up["V"], zero_b).reshape(n, 3, f)
        vv_norm = jnp.sqrt(jnp.sum(vv * vv, axis=1) + 1e-12)               # (N, F)
        a = pallas_mlp2(jnp.concatenate([s, vv_norm], axis=-1),
                        up["a_w1"], up["a_b1"], up["a_w2"], up["a_b2"])    # (N, 3F)
        a_vv, a_sv, a_ss = jnp.split(a, 3, axis=-1)
        v = v + a_vv[:, None, :] * uv
        s = s + a_sv * jnp.sum(uv * vv, axis=1) + a_ss

    rd = params["readout"]
    e_atom = pallas_mlp2(s, rd["w1"], rd["b1"], rd["w2"], rd["b2"])        # (N, 1)
    return e_atom


# --------------------------- PainnDispersion -----------------------------------
class PainnDispersion:
    def __init__(self, modelparams, painn_params=None):
        self.functional = modelparams["functional"]
        self.disp_type = modelparams["disp_type"]
        assert self.disp_type == "bj"  # TODO(synk): only BJ damping implemented
        self.d3 = D3BJ_PARAMS[self.functional]
        self.params = (painn_params if painn_params is not None
                       else init_painn_params(jax.random.PRNGKey(0)))
        self.pool_keys = ["energy"]        # painn_model.pool_dic.keys()
        self.grad_keys = ["energy_grad"]   # painn_model.grad_keys

    def _disp_atom_feats(self, z, xyz, mol_idx):
        # O(N) per-atom dispersion data, packed as (N_pad, 8) rows + its (8, N_pad) transpose.
        # TODO(synk): real Grimme D3 CN-dependent C6 reference tables are not reproduced.
        n = z.shape[0]
        elem = jnp.arange(100, dtype=jnp.float32)
        c6_table = 2.0 + 0.5 * elem
        r4r2_table = 1.5 + 0.05 * elem
        c6_i = c6_table[z]
        rr_i = r4r2_table[z]

        tile = _row_tile(n)
        n_pad = _round_up(n, tile)
        feats = jnp.stack([xyz[:, 0], xyz[:, 1], xyz[:, 2],
                           c6_i, rr_i,
                           mol_idx.astype(jnp.float32),
                           jnp.ones((n,), jnp.float32),
                           jnp.zeros((n,), jnp.float32)], axis=1)          # (N, 8)
        row_feats = jnp.zeros((n_pad, 8), jnp.float32).at[:n].set(feats)
        if n_pad > n:
            row_feats = row_feats.at[n:, 5].set(-1.0)                      # padded atoms: no mol
        col_feats = jnp.transpose(row_feats)                               # (8, N_pad)
        return row_feats, col_feats

    def get_dispersion_and_grad(self, batch, xyz):
        z = batch["nxyz"][:, 0].astype(jnp.int32)
        mol_idx = batch["mol_idx"]
        n = z.shape[0]
        row_feats, col_feats = self._disp_atom_feats(z, xyz, mol_idx)
        packed = dispersion_call(row_feats, col_feats,
                                 self.d3["s6"], self.d3["s8"],
                                 self.d3["a1"], self.d3["a2"])
        e_atom = packed[:n, 0]                                             # Hartree per atom
        grad = packed[:n, 1:4]                                             # Hartree / Angstrom
        n_mol = batch["num_atoms"].shape[0]
        e_disp = jnp.zeros((n_mol,), jnp.float32).at[mol_idx].add(e_atom)  # per-molecule pool
        return (e_disp * HARTREE_TO_KCAL_MOL,                              # e_disp * HARTREE_TO_KCAL_MOL
                grad * HARTREE_TO_KCAL_MOL)                                # compute_grad(xyz, e_disp)

    def get_dispersion(self, batch, xyz):
        e_disp, _ = self.get_dispersion_and_grad(batch, xyz)
        return e_disp

    def run(self, batch, xyz=None, requires_stress=False, grimme_disp=False,
            inference=False):
        nxyz = batch["nxyz"]
        z = nxyz[:, 0].astype(jnp.int32)
        if xyz is None:
            xyz = nxyz[:, 1:].astype(jnp.float32)
        mol_idx = batch["mol_idx"]
        n_mol = batch["num_atoms"].shape[0]

        # painn_model.atomwise + painn_model.pool (per-molecule segment-sum, not a 1-wide matmul);
        # energy_grad = compute_grad(xyz, energy) via VJP through the Pallas kernels.
        def painn_energy(coords):
            e_atom = painn_atomwise(self.params, z, coords, mol_idx)       # (N, 1)
            return jnp.zeros((n_mol, 1), jnp.float32).at[mol_idx].add(e_atom)

        energy_mol, vjp_fn = jax.vjp(painn_energy, xyz)
        all_results = {"energy": energy_mol[:, 0]}
        if "energy_grad" in self.grad_keys:
            all_results["energy_grad"] = vjp_fn(
                jnp.ones((n_mol, 1), jnp.float32))[0]

        if not grimme_disp:
            e_disp, disp_grad = self.get_dispersion_and_grad(batch, xyz)
            for key in self.pool_keys:
                grad_key = "%s_grad" % key
                if grad_key in self.grad_keys:
                    all_results[key] = all_results[key] + e_disp
                    all_results[grad_key] = all_results[grad_key] + disp_grad

        # TODO(synk): requires_stress branch (stress_volume) and grimme_dispersion fallback
        # (external dftd3 call) have no clean Pallas equivalent here.
        return all_results, xyz

    def forward(self, batch, xyz=None, requires_stress=False, grimme_disp=False,
                inference=False, **kwargs):
        results, _ = self.run(batch=batch, xyz=xyz, requires_stress=requires_stress,
                              grimme_disp=grimme_disp, inference=inference)
        return results


# ----------------------------------- main --------------------------------------
if __name__ == "__main__":
    key = jax.random.PRNGKey(0)
    kz, kx = jax.random.split(key)

    n_atoms, n_mol = 8, 2
    z = jax.random.randint(kz, (n_atoms,), 1, 10)
    xyz = (1.5 * jax.random.normal(kx, (n_atoms, 3))).astype(jnp.float32)
    mol_idx = jnp.array([0, 0, 0, 0, 1, 1, 1, 1], jnp.int32)
    nxyz = jnp.concatenate([z[:, None].astype(jnp.float32), xyz], axis=1)

    batch = {
        "nxyz": nxyz,
        "num_atoms": jnp.array([4, 4], jnp.int32),
        "mol_idx": mol_idx,
    }

    model = PainnDispersion({
        "functional": "b3lyp",
        "disp_type": "bj",
        "feat_dim": F_DIM,
        "n_rbf": N_RBF,
        "cutoff": CUTOFF,
        "num_conv": NUM_CONV,
    })

    results = model.forward(batch)
    results = jax.block_until_ready(results)

    assert results["energy"].shape == (n_mol,)
    assert results["energy_grad"].shape == (n_atoms, 3)
    assert not bool(jnp.any(jnp.isnan(results["energy"])))
    assert not bool(jnp.any(jnp.isnan(results["energy_grad"])))
    print("KERNEL_OK")
</pallas_src>

<mosaic_0001>
module attributes {stable_mosaic.version = 11 : i64} {
  func.func @_mlp2_fwd_kernel(%arg0: i32, %arg1: memref<8x32xf32, #tpu.memory_space<vmem>>, %arg2: memref<32x32xf32, #tpu.memory_space<vmem>>, %arg3: memref<1x32xf32, #tpu.memory_space<vmem>>, %arg4: memref<32x96xf32, #tpu.memory_space<vmem>>, %arg5: memref<1x96xf32, #tpu.memory_space<vmem>>, %arg6: memref<8x96xf32, #tpu.memory_space<vmem>>, %arg7: memref<8x32xf32, #tpu.memory_space<vmem>>) attributes {dimension_semantics = [#tpu.dimension_semantics<parallel>], iteration_bounds = array<i64: 1>, scalar_prefetch = 0 : i64, scratch_operands = 0 : i64, tpu.core_type = #tpu.core_type<tc>, window_params = [{transform_indices = @transform_0, window_bounds = array<i64: 8, 32>}, {pipeline_mode = #tpu.pipeline_mode<synchronous>, transform_indices = @transform_1, window_bounds = array<i64: 32, 32>}, {pipeline_mode = #tpu.pipeline_mode<synchronous>, transform_indices = @transform_2, window_bounds = array<i64: 1, 32>}, {pipeline_mode = #tpu.pipeline_mode<synchronous>, transform_indices = @transform_3, window_bounds = array<i64: 32, 96>}, {pipeline_mode = #tpu.pipeline_mode<synchronous>, transform_indices = @transform_4, window_bounds = array<i64: 1, 96>}, {transform_indices = @transform_5, window_bounds = array<i64: 8, 96>}, {transform_indices = @transform_6, window_bounds = array<i64: 8, 32>}]} {
    %c0 = arith.constant 0 : index
    %c0_0 = arith.constant 0 : index
    %0 = vector.load %arg1[%c0, %c0_0] : memref<8x32xf32, #tpu.memory_space<vmem>>, vector<8x32xf32>
    %1 = arith.truncf %0 : vector<8x32xf32> to vector<8x32xbf16>
    %c0_1 = arith.constant 0 : index
    %c0_2 = arith.constant 0 : index
    %2 = vector.load %arg2[%c0_1, %c0_2] : memref<32x32xf32, #tpu.memory_space<vmem>>, vector<32x32xf32>
    %3 = arith.truncf %2 : vector<32x32xf32> to vector<32x32xbf16>
    %cst = arith.constant dense<0.000000e+00> : vector<8x32xf32>
    %4 = tpu.matmul %1, %3, %cst {dimension_numbers = #tpu.dot_dimension_numbers<[1], [0], [0], [1], [0, 0, 1, 1], [], []>} : vector<8x32xbf16>, vector<32x32xbf16>, vector<8x32xf32> -> vector<8x32xf32>
    %c0_3 = arith.constant 0 : index
    %c0_4 = arith.constant 0 : index
    %5 = vector.load %arg3[%c0_3, %c0_4] : memref<1x32xf32, #tpu.memory_space<vmem>>, vector<1x32xf32>
    %6 = vector.broadcast %5 : vector<1x32xf32> to vector<8x32xf32>
    %7 = arith.addf %4, %6 : vector<8x32xf32>
    %8 = arith.negf %7 : vector<8x32xf32>
    %9 = math.exp %8 : vector<8x32xf32>
    %cst_5 = arith.constant 1.000000e+00 : f32
    %10 = vector.broadcast %cst_5 : f32 to vector<8x32xf32>
    %11 = arith.addf %10, %9 : vector<8x32xf32>
    %12 = arith.divf %10, %11 : vector<8x32xf32>
    %13 = arith.mulf %7, %12 : vector<8x32xf32>
    %14 = arith.truncf %13 : vector<8x32xf32> to vector<8x32xbf16>
    %c0_6 = arith.constant 0 : index
    %c0_7 = arith.constant 0 : index
    %15 = vector.load %arg4[%c0_6, %c0_7] : memref<32x96xf32, #tpu.memory_space<vmem>>, vector<32x96xf32>
    %16 = arith.truncf %15 : vector<32x96xf32> to vector<32x96xbf16>
    %cst_8 = arith.constant dense<0.000000e+00> : vector<8x96xf32>
    %17 = tpu.matmul %14, %16, %cst_8 {dimension_numbers = #tpu.dot_dimension_numbers<[1], [0], [0], [1], [0, 0, 1, 1], [], []>} : vector<8x32xbf16>, vector<32x96xbf16>, vector<8x96xf32> -> vector<8x96xf32>
    %c0_9 = arith.constant 0 : index
    %c0_10 = arith.constant 0 : index
    %18 = vector.load %arg5[%c0_9, %c0_10] : memref<1x96xf32, #tpu.memory_space<vmem>>, vector<1x96xf32>
    %19 = vector.broadcast %18 : vector<1x96xf32> to vector<8x96xf32>
    %20 = arith.addf %17, %19 : vector<8x96xf32>
    %c0_11 = arith.constant 0 : index
    %c0_12 = arith.constant 0 : index
    %21 = vector.load %arg6[%c0_11, %c0_12] : memref<8x96xf32, #tpu.memory_space<vmem>>, vector<8x96xf32>
    tpu.vector_store %arg6[%c0_11, %c0_12], %20 {strides = array<i32>} : memref<8x96xf32, #tpu.memory_space<vmem>>, vector<8x96xf32>,
    %c0_13 = arith.constant 0 : index
    %c0_14 = arith.constant 0 : index
    %22 = vector.load %arg7[%c0_13, %c0_14] : memref<8x32xf32, #tpu.memory_space<vmem>>, vector<8x32xf32>
    tpu.vector_store %arg7[%c0_13, %c0_14], %7 {strides = array<i32>} : memref<8x32xf32, #tpu.memory_space<vmem>>, vector<8x32xf32>,
    return
  }
  func.func @transform_0(%arg0: i32) -> (i32, i32) {
    %c0_i32 = arith.constant 0 : i32
    %c0_i32_0 = arith.constant 0 : i32
    return %arg0, %c0_i32 : i32, i32
  }
  func.func @transform_1(%arg0: i32) -> (i32, i32) {
    %c0_i32 = arith.constant 0 : i32
    %c0_i32_0 = arith.constant 0 : i32
    %c0_i32_1 = arith.constant 0 : i32
    return %c0_i32, %c0_i32_0 : i32, i32
  }
  func.func @transform_2(%arg0: i32) -> (i32, i32) {
    %c0_i32 = arith.constant 0 : i32
    %c0_i32_0 = arith.constant 0 : i32
    %c0_i32_1 = arith.constant 0 : i32
    return %c0_i32, %c0_i32_0 : i32, i32
  }
  func.func @transform_3(%arg0: i32) -> (i32, i32) {
    %c0_i32 = arith.constant 0 : i32
    %c0_i32_0 = arith.constant 0 : i32
    %c0_i32_1 = arith.constant 0 : i32
    return %c0_i32, %c0_i32_0 : i32, i32
  }
  func.func @transform_4(%arg0: i32) -> (i32, i32) {
    %c0_i32 = arith.constant 0 : i32
    %c0_i32_0 = arith.constant 0 : i32
    %c0_i32_1 = arith.constant 0 : i32
    return %c0_i32, %c0_i32_0 : i32, i32
  }
  func.func @transform_5(%arg0: i32) -> (i32, i32) {
    %c0_i32 = arith.constant 0 : i32
    %c0_i32_0 = arith.constant 0 : i32
    return %arg0, %c0_i32 : i32, i32
  }
  func.func @transform_6(%arg0: i32) -> (i32, i32) {
    %c0_i32 = arith.constant 0 : i32
    %c0_i32_0 = arith.constant 0 : i32
    return %arg0, %c0_i32 : i32, i32
  }
}

</mosaic_0001>

<llo_original>
// kernel: tpu_custom_call.1
$region0: #{tpu_custom_call.1}
  #allocation0 [shape = 'u32[]', space=smem, size = 0x4, offset = 0x4, fixed_abs, tag = 'smem constant byte address 0x4 - core index']
  #allocation1 [shape = 'u32[72,128]{1,0:T(1,128)}', space=vmem, size = 0x9000, scoped, tag = 'internal scratch']
  %s0 = inlined_call_operand.hbm [shape: f32[8,32], index: 0, kind: input, shape index: {}]
  %s1 = inlined_call_operand.hbm [shape: f32[32,32], index: 1, kind: input, shape index: {}]
  %s2 = inlined_call_operand.vmem [shape: f32[1,32], index: 2, kind: input, shape index: {}]
  %s3 = inlined_call_operand.hbm [shape: f32[32,96], index: 3, kind: input, shape index: {}]
  %s4 = inlined_call_operand.vmem [shape: f32[1,96], index: 4, kind: input, shape index: {}]
  %s5 = inlined_call_operand.hbm [shape: f32[8,96], index: 5, kind: output, shape index: {0}]
  %s6 = inlined_call_operand.hbm [shape: f32[8,32], index: 6, kind: output, shape index: {1}]
  %7 = xla_tuple %s5, %s6
  %s8 = sld [smem:[#allocation0]]
  $region50: #{tpu_custom_call.1} parent=0
    _
  %s10 = ssub.s32 1, %s8
  %s11 = scalar_select 0, %s10, %s8
  $region1: #{tpu_custom_call.1} parent=0
    #allocation2 [shape = 'u8[4096]{0}', space=vmem, size = 0x1000, scoped, tag = 'input window, operand 0, single buffered']
    #allocation3 [shape = 's32[1]{0}', space=sflag, size = 0x4, scoped, tag = 'scoped memory for tpu_custom_call.1']
    #allocation4 [shape = 's32[1]{0}', space=sflag, size = 0x4, scoped, tag = 'scoped memory for tpu_custom_call.1']
    #allocation5 [shape = 'u8[16384]{0}', space=vmem, size = 0x4000, scoped, tag = 'input window, operand 1, single buffered']
    #allocation6 [shape = 's32[1]{0}', space=sflag, size = 0x4, scoped, tag = 'scoped memory for tpu_custom_call.1']
    #allocation7 [shape = 'u8[16384]{0}', space=vmem, size = 0x4000, scoped, tag = 'input window, operand 3, single buffered']
    #allocation8 [shape = 'u8[4096]{0}', space=vmem, size = 0x1000, scoped, tag = 'output window, operand 0, single buffered']
    #allocation9 [shape = 'u8[4096]{0}', space=vmem, size = 0x1000, scoped, tag = 'output window, operand 1, single buffered']
    #allocation10 [shape = 's32[1]{0}', space=sflag, size = 0x4, scoped, tag = 'scoped memory for tpu_custom_call.1']
    %12 = vsyncpa [#allocation3], 0
    %13 = vsyncpa [#allocation6], 0
    %14 = vsyncpa [#allocation4], 0
    %15 = vsyncpa [#allocation10], 0
    // Predicated region
    $region2: #{tpu_custom_call.1} parent=1 // pred_check
      _
    $region3: #{tpu_custom_call.1} parent=1 // pred_check_branch
      %17 = sbr.rel (0) target = $region5
    $region4: #{tpu_custom_call.1} parent=1 // pred_region
      %19 = vsyncadd [#allocation3], 0
      %s21 = sshll.u32 %s0, 4
      %s22 = int_to_ptr.hbm [resolvable:$true] %s21
      %s23 = sshll.u32 [#allocation2], 4
      %s24 = int_to_ptr.vmem [resolvable:$true] %s23
      %26 = dma.hbm_to_vmem [thread:$0]  %s22, 128, %s24, [#allocation3]
    $region5: #{tpu_custom_call.1} parent=1 // pred_fallthru
      _
    // Predicated region
    $region6: #{tpu_custom_call.1} parent=1 // pred_check
      _
    $region7: #{tpu_custom_call.1} parent=1 // pred_check_branch
      %28 = sbr.rel (0) target = $region9
    $region8: #{tpu_custom_call.1} parent=1 // pred_region
      %30 = vsyncadd [#allocation6], 0
      %s31 = sshll.u32 %s1, 4
      %s32 = int_to_ptr.hbm [resolvable:$true] %s31
      %s33 = sshll.u32 [#allocation5], 4
      %s34 = int_to_ptr.vmem [resolvable:$true] %s33
      %39 = dma.hbm_to_vmem [thread:$0]  %s32, 512, %s34, [#allocation6], 128, 128, 8
    $region9: #{tpu_custom_call.1} parent=1 // pred_fallthru
      _
    // Predicated region
    $region10: #{tpu_custom_call.1} parent=1 // pred_check
      _
    $region11: #{tpu_custom_call.1} parent=1 // pred_check_branch
      %41 = sbr.rel (0) target = $region13
    $region12: #{tpu_custom_call.1} parent=1 // pred_region
      _
    $region13: #{tpu_custom_call.1} parent=1 // pred_fallthru
      _
    // Predicated region
    $region14: #{tpu_custom_call.1} parent=1 // pred_check
      _
    $region15: #{tpu_custom_call.1} parent=1 // pred_check_branch
      %43 = sbr.rel (0) target = $region17
    $region16: #{tpu_custom_call.1} parent=1 // pred_region
      %45 = vsyncadd [#allocation6], 0
      %s46 = sshll.u32 %s3, 4
      %s47 = int_to_ptr.hbm [resolvable:$true] %s46
      %s48 = sshll.u32 [#allocation7], 4
      %s49 = int_to_ptr.vmem [resolvable:$true] %s48
      %54 = dma.hbm_to_vmem [thread:$0]  %s47, 512, %s49, [#allocation6], 128, 128, 8
    $region17: #{tpu_custom_call.1} parent=1 // pred_fallthru
      _
    // Predicated region
    $region18: #{tpu_custom_call.1} parent=1 // pred_check
      _
    $region19: #{tpu_custom_call.1} parent=1 // pred_check_branch
      %56 = sbr.rel (0) target = $region21
    $region20: #{tpu_custom_call.1} parent=1 // pred_region
      _
    $region21: #{tpu_custom_call.1} parent=1 // pred_fallthru
      _
    // Predicated region
    $region22: #{tpu_custom_call.1} parent=1 // pred_check
      _
    $region23: #{tpu_custom_call.1} parent=1 // pred_check_branch
      %58 = sbr.rel (0) target = $region25
    $region24: #{tpu_custom_call.1} parent=1 // pred_region
      %60 = dma.done [#allocation3], 128
    $region25: #{tpu_custom_call.1} parent=1 // pred_fallthru
      _
    // Predicated region
    $region26: #{tpu_custom_call.1} parent=1 // pred_check
      _
    $region27: #{tpu_custom_call.1} parent=1 // pred_check_branch
      %62 = sbr.rel (0) target = $region29
    $region28: #{tpu_custom_call.1} parent=1 // pred_region
      %64 = dma.done [#allocation6], 512
    $region29: #{tpu_custom_call.1} parent=1 // pred_fallthru
      _
    // Predicated region
    $region30: #{tpu_custom_call.1} parent=1 // pred_check
      _
    $region31: #{tpu_custom_call.1} parent=1 // pred_check_branch
      %66 = sbr.rel (0) target = $region33
    $region32: #{tpu_custom_call.1} parent=1 // pred_region
      %68 = dma.done [#allocation6], 512
    $region33: #{tpu_custom_call.1} parent=1 // pred_fallthru
      _
    %v70 = vld [vmem:[#allocation2] sm:$0xff]
    %v71 = vpack.c.bf16 %v70, %v70
    %v72 = vld [vmem:[#allocation5] sm:$0xff]
    %v73 = vld [vmem:[#allocation5 + $0x8] sm:$0xff]
    %v74 = vld [vmem:[#allocation5 + $0x10] sm:$0xff]
    %v75 = vld [vmem:[#allocation5 + $0x18] sm:$0xff]
    %v76 = vpack.c.bf16 %v73, %v72
    %v77 = vpack.c.bf16 %v75, %v74
    %v78 = vld [vmem:[%s2] sm:$0x1]
    %v80 = vperm.slane %v78, 0
    %vm82 = vcmask 261120
    %v84 = vsel %vm82, %v71, 0
    %86 = vmatpush.bf16.msra.mxu0 0
    %87 = vmatpush.bf16.msra.mxu0 0
    %88 = vmatpush.bf16.msra.mxu0 0
    %89 = vmatpush.bf16.msra.mxu0 0
    %90 = vmatpush.bf16.msra.mxu0 0
    %91 = vmatpush.bf16.msra.mxu0 0
    %92 = vmatpush.bf16.msra.mxu0 %v77
    %93 = vmatpush.bf16.msra.mxu0 %v76
    %94 = vmatmul.bf16.gmra.mxu0 %v84
    %v95 = vpop.f32.mrf.mxu0
    %v96 = vadd.f32 %v80, %v95
    %v97 = vpop.f32.mrf.mxu0
    %98 = vdwg.mxu0
    %v99 = vxor.u32 %v96, 2147483648
    %v100 = vmul.f32 %v99, 1.442695
    %v101 = vpow.pop %v100
    %v102 = vadd.f32 %v101, 1.0
    %v103 = vrcp.pop %v102
    %v104 = vmul.f32 %v102, %v103
    %v105 = vsub.f32 1.0, %v104
    %v106 = vmul.f32 %v103, %v105
    %v107 = vadd.f32 %v103, %v106
    %vm108 = vweird.f32 %v102
    %vm109 = vweird.f32 %v103
    %vm110 = vmor %vm108, %vm109
    %v111 = vsel %vm110, %v103, %v107
    %v112 = vand.u32 2147483647, %v102
    %vm113 = vcmp.eq.f32.partialorder %v112, 8.507059e+37
    %v114 = vand.u32 %v102, 2147483648
    %v115 = vor.u32 1.1754944e-38, %v114
    %v116 = vsel %vm113, %v115, %v111
    %v117 = vmul.f32 1.0, %v116
    %v118 = vmul.f32 %v96, %v117
    %v119 = vpack.c.bf16 %v118, %v118
    %v120 = vld [vmem:[#allocation7] sm:$0xff]
    %v121 = vld [vmem:[#allocation7 + $0x8] sm:$0xff]
    %v122 = vld [vmem:[#allocation7 + $0x10] sm:$0xff]
    %v123 = vld [vmem:[#allocation7 + $0x18] sm:$0xff]
    %v124 = vpack.c.bf16 %v121, %v120
    %v125 = vpack.c.bf16 %v123, %v122
    %v126 = vld [vmem:[%s4] sm:$0x1]
    %v128 = vperm.slane %v126, 0
    %v131 = vsel %vm82, %v119, 0
    %133 = vmatpush.bf16.msra.mxu0 0
    %134 = vmatpush.bf16.msra.mxu0 0
    %135 = vmatpush.bf16.msra.mxu0 0
    %136 = vmatpush.bf16.msra.mxu0 0
    %137 = vmatpush.bf16.msra.mxu0 0
    %138 = vmatpush.bf16.msra.mxu0 0
    %139 = vmatpush.bf16.msra.mxu0 %v125
    %140 = vmatpush.bf16.msra.mxu0 %v124
    %141 = vmatmul.bf16.gmra.mxu0 %v131
    %v142 = vpop.f32.mrf.mxu0
    %v143 = vadd.f32 %v128, %v142
    %v144 = vpop.f32.mrf.mxu0
    %145 = vdwg.mxu0
    %vm146 = vcmask 785408
    %147 = vst.msk [vmem:[#allocation8] sm:$0xff] %vm146, %v143
    %148 = vst.msk [vmem:[#allocation9] sm:$0xff] %vm82, %v96
    // Predicated region
    $region34: #{tpu_custom_call.1} parent=1 // pred_check
      _
    $region35: #{tpu_custom_call.1} parent=1 // pred_check_branch
      %150 = sbr.rel (0) target = $region37
    $region36: #{tpu_custom_call.1} parent=1 // pred_region
      %152 = vsyncadd [#allocation4], 0
      %s154 = sshll.u32 [#allocation8], 4
      %s155 = int_to_ptr.vmem [resolvable:$true] %s154
      %s156 = sshll.u32 %s5, 4
      %s157 = int_to_ptr.hbm [resolvable:$true] %s156
      %159 = dma.vmem_to_hbm [thread:$0]  %s155, 128, %s157, [#allocation4]
    $region37: #{tpu_custom_call.1} parent=1 // pred_fallthru
      _
    // Predicated region
    $region38: #{tpu_custom_call.1} parent=1 // pred_check
      _
    $region39: #{tpu_custom_call.1} parent=1 // pred_check_branch
      %161 = sbr.rel (0) target = $region41
    $region40: #{tpu_custom_call.1} parent=1 // pred_region
      %163 = vsyncadd [#allocation10], 0
      %s165 = sshll.u32 [#allocation9], 4
      %s166 = int_to_ptr.vmem [resolvable:$true] %s165
      %s167 = sshll.u32 %s6, 4
      %s168 = int_to_ptr.hbm [resolvable:$true] %s167
      %170 = dma.vmem_to_hbm [thread:$0]  %s166, 128, %s168, [#allocation10]
    $region41: #{tpu_custom_call.1} parent=1 // pred_fallthru
      _
    // Predicated region
    $region42: #{tpu_custom_call.1} parent=1 // pred_check
      _
    $region43: #{tpu_custom_call.1} parent=1 // pred_check_branch
      %172 = sbr.rel (0) target = $region45
    $region44: #{tpu_custom_call.1} parent=1 // pred_region
      %174 = dma.done [#allocation4], 128
    $region45: #{tpu_custom_call.1} parent=1 // pred_fallthru
      _
    // Predicated region
    $region46: #{tpu_custom_call.1} parent=1 // pred_check
      _
    $region47: #{tpu_custom_call.1} parent=1 // pred_check_branch
      %176 = sbr.rel (0) target = $region49
    $region48: #{tpu_custom_call.1} parent=1 // pred_region
      %178 = dma.done [#allocation10], 128
    $region49: #{tpu_custom_call.1} parent=1 // pred_fallthru
      _
    %179 = vsyncpa [#allocation3], 1
    %180 = vsyncpa [#allocation6], 1
    %181 = vsyncpa [#allocation4], 1
    %182 = vsyncpa [#allocation10], 1

</llo_original>
